<compile_context>
chip_gen: v7x
topology: tpu7x:2x2x1
jax: 0.10.0
libtpu: 0.0.40
codegen_flags: <defaults>
</compile_context>

<pallas_src>
import functools

import jax
import jax.numpy as jnp
from jax.experimental import pallas as pl
from jax.experimental.pallas import tpu as pltpu


def _round_up(x, m):
    return (x + m - 1) // m * m


def _make_kernel(K, pad, L, R, RC, TL, P_alloc):
    inv_k = 1.0 / float(K)
    halo = TL + K - 1          # input lanes needed for one TL-wide output tile
    n_sub = R // RC            # row sub-chunks per block (register-pressure bound)
    tail0 = pad + L            # first index of the right zero region in the scratch
    tail_len = P_alloc - tail0

    def movsum(xwin):
        # xwin: (RC, halo) f32 -> (RC, TL) sum over K consecutive lanes.
        if K <= 8:
            acc = xwin[:, 0:TL]
            for k in range(1, K):               # static -> unrolled taps
                acc = acc + xwin[:, k:k + TL]
            return acc
        # Large K: inclusive prefix sum along lanes (log2(halo) shift+add steps),
        # then moving sum = csum[j+K-1] - csum[j-1]  (csum[-1] := 0).
        cs = xwin
        s = 1
        while s < halo:
            cs = cs + jnp.concatenate(
                [jnp.zeros((RC, s), jnp.float32), cs[:, :halo - s]], axis=1)
            s *= 2
        upper = cs[:, K - 1:K - 1 + TL]
        lower = jnp.concatenate(
            [jnp.zeros((RC, 1), jnp.float32), cs[:, :TL - 1]], axis=1)
        return upper - lower

    def kernel(x_ref, o_ref, xp_ref):
        # x_ref : (R, L)        input rows for this row block (resident across t)
        # o_ref : (R, TL)       dense (stride-1) moving-average tile, lane-dense
        # xp_ref: (R, P_alloc)  f32 zero-padded sequence scratch, filled at t == 0
        t = pl.program_id(1)

        # Correctness relies on the t axis being iterated sequentially per row
        # block on one core ("arbitrary"); never mark it "parallel".
        @pl.when(t == 0)
        def _():
            # Zero only the halo regions, not the whole scratch.
            if pad > 0:
                xp_ref[:, :pad] = jnp.zeros((R, pad), xp_ref.dtype)
            if tail_len > 0:
                xp_ref[:, tail0:] = jnp.zeros((R, tail_len), xp_ref.dtype)
            xp_ref[:, pad:tail0] = x_ref[...].astype(xp_ref.dtype)

        base = pl.multiple_of(t * TL, 128)      # TL is always a multiple of 128

        def compute_chunk(r0):
            # Single VMEM load of the halo'd window for this row sub-chunk; all
            # taps / scan steps are in-register lane shifts + adds.
            xwin = xp_ref[pl.ds(r0, RC), pl.ds(base, halo)]
            o_ref[pl.ds(r0, RC), :] = (movsum(xwin) * inv_k).astype(o_ref.dtype)

        if n_sub == 1:
            compute_chunk(0)
        else:
            def body(i, carry):
                compute_chunk(pl.multiple_of(i * RC, RC))
                return carry
            jax.lax.fori_loop(0, n_sub, body, 0, unroll=True)

    return kernel


@functools.partial(jax.jit, static_argnames=("kernel_size", "stride"))
def moving_avg(x, *, kernel_size: int, stride: int):
    """x: (B, L, C) float array. Returns (B, L_out, C), matching the PyTorch module."""
    B, L, C = x.shape
    K = int(kernel_size)
    s = int(stride)
    pad = K // 2
    M_dense = L + 2 * pad - K + 1                 # stride-1 output length
    L_out = (L + 2 * pad - K) // s + 1            # AvgPool1d output length

    itemsize = jnp.dtype(x.dtype).itemsize
    R_min = {4: 8, 2: 16, 1: 32}.get(itemsize, 8)   # min sublane tile per dtype
    RC = 8 if itemsize >= 4 else R_min              # compute sub-chunk rows

    # ---- lane-dense layout: (B, L, C) -> (B*C, L); pooled axis on lanes ----
    rows = B * C
    rows_min = _round_up(rows, R_min)

    # Row (sublane) tile: large enough that each grid step moves 100s of KiB,
    # but keep >= 2 row blocks when rows allow it (both v7x TensorCores busy).
    R = min(64, rows_min)
    if rows > R_min and rows_min // R < 2:
        R = max(R_min, (rows_min // 2 // R_min) * R_min)
    rows_p = _round_up(rows, R)
    n_r = rows_p // R

    # Output lane tile: always a multiple of 128 (unmasked stores), up to 1024.
    TL_cap = 1024 if itemsize >= 4 else 512
    TL = min(TL_cap, _round_up(M_dense, 128))
    n_t = pl.cdiv(M_dense, TL)
    M_alloc = n_t * TL                            # padded so blocks divide exactly
    P_alloc = _round_up(M_alloc + K - 1, 128)     # padded-sequence scratch length

    xt = jnp.swapaxes(x, 1, 2).reshape(rows, L)
    if rows_p != rows:                            # keep sublane tiles full
        xt = jnp.pad(xt, ((0, rows_p - rows), (0, 0)))

    kern = _make_kernel(K, pad, L, R, RC, TL, P_alloc)

    # VMEM: double-buffered input block + output tile (input dtype) + f32 scratch.
    footprint = itemsize * R * 2 * (L + TL) + 4 * R * P_alloc
    vmem_limit = int(min(64 * 1024 * 1024, max(32 * 1024 * 1024, 3 * footprint)))

    cost = pl.CostEstimate(
        flops=int(rows_p) * int(M_alloc) * (min(K, 24) + 1),
        transcendentals=0,
        bytes_accessed=(int(rows_p) * L + int(rows_p) * int(M_alloc)) * itemsize,
    )

    dense = pl.pallas_call(
        kern,
        out_shape=jax.ShapeDtypeStruct((rows_p, M_alloc), x.dtype),
        grid=(n_r, n_t),
        in_specs=[pl.BlockSpec((R, L), lambda r, t: (r, 0))],   # resident per row-block
        out_specs=pl.BlockSpec((R, TL), lambda r, t: (r, t)),
        scratch_shapes=[pltpu.VMEM((R, P_alloc), jnp.float32)],
        compiler_params=pltpu.CompilerParams(
            dimension_semantics=("parallel", "arbitrary"),
            vmem_limit_bytes=vmem_limit,
        ),
        cost_estimate=cost,
    )(xt)

    out = dense[:rows, :M_dense]
    if s > 1:
        # AvgPool1d with stride s == dense stride-1 result decimated by s.
        out = out[:, ::s]
    # Back to (B, L_out, C); slice/decimation fuses into this transpose.
    return out.reshape(B, C, L_out).swapaxes(1, 2)


def _reference_moving_avg(x, kernel_size, stride):
    """Pure-JAX reference matching nn.AvgPool1d(k, s, padding=k//2)."""
    pad = kernel_size // 2
    xp = jnp.pad(x.astype(jnp.float32), ((0, 0), (pad, pad), (0, 0)))
    L_dense = xp.shape[1] - kernel_size + 1
    acc = sum(xp[:, k:k + L_dense, :] for k in range(kernel_size))
    dense = acc / kernel_size
    return dense[:, ::stride, :].astype(x.dtype)


if __name__ == "__main__":
    root = jax.random.PRNGKey(0)
    k1, k2, k3 = jax.random.split(root, 3)

    # Primary DLinear-style case: (batch=2, seq=16, channels=8), k=5, stride=1.
    x = jax.random.normal(k1, (2, 16, 8), dtype=jnp.float32)
    out = jax.block_until_ready(moving_avg(x, kernel_size=5, stride=1))
    ref = _reference_moving_avg(x, 5, 1)
    assert out.shape == ref.shape, (out.shape, ref.shape)
    assert jnp.allclose(out, ref, atol=1e-5, rtol=1e-5), "mismatch (k=5, s=1)"

    # Even kernel, stride>1, C not a multiple of 8 (row padding + decimation).
    x2 = jax.random.normal(k2, (2, 16, 7), dtype=jnp.float32)
    out2 = jax.block_until_ready(moving_avg(x2, kernel_size=4, stride=2))
    ref2 = _reference_moving_avg(x2, 4, 2)
    assert out2.shape == ref2.shape, (out2.shape, ref2.shape)
    assert jnp.allclose(out2, ref2, atol=1e-5, rtol=1e-5), "mismatch (k=4, s=2)"

    # Longer sequence: multiple L_out tiles, 2 row blocks, prefix-sum path (K=25).
    x3 = jax.random.normal(k3, (4, 1100, 8), dtype=jnp.float32)
    out3 = jax.block_until_ready(moving_avg(x3, kernel_size=25, stride=1))
    ref3 = _reference_moving_avg(x3, 25, 1)
    assert out3.shape == ref3.shape, (out3.shape, ref3.shape)
    assert jnp.allclose(out3, ref3, atol=1e-4, rtol=1e-4), "mismatch (k=25, s=1)"

    print("KERNEL_OK")
</pallas_src>

<mosaic_0001>
module attributes {stable_mosaic.version = 11 : i64} {
  func.func @kernel(%arg0: i32, %arg1: i32, %arg2: memref<8x16xf32, #tpu.memory_space<vmem>>, %arg3: memref<8x128xf32, #tpu.memory_space<vmem>>, %arg4: memref<8x256xf32, #tpu.memory_space<vmem>>) attributes {dimension_semantics = [#tpu.dimension_semantics<parallel>, #tpu.dimension_semantics<arbitrary>], iteration_bounds = array<i64: 2, 1>, scalar_prefetch = 0 : i64, scratch_operands = 1 : i64, tpu.core_type = #tpu.core_type<tc>, window_params = [{transform_indices = @transform_0, window_bounds = array<i64: 8, 16>}, {transform_indices = @transform_1, window_bounds = array<i64: 8, 128>}]} {
    %c0_i32 = arith.constant 0 : i32
    %0 = arith.cmpi eq, %arg1, %c0_i32 : i32
    %1 = arith.extui %0 : i1 to i32
    %c0_i32_0 = arith.constant 0 : i32
    %2 = arith.cmpi ne, %1, %c0_i32_0 : i32
    scf.if %2 {
      %cst_3 = arith.constant 0.000000e+00 : f32
      %19 = vector.broadcast %cst_3 : f32 to vector<8x2xf32>
      %c0_4 = arith.constant 0 : index
      %c0_5 = arith.constant 0 : index
      %20 = vector.load %arg4[%c0_4, %c0_5] : memref<8x256xf32, #tpu.memory_space<vmem>>, vector<8x2xf32>
      tpu.vector_store %arg4[%c0_4, %c0_5], %19 {strides = array<i32>} : memref<8x256xf32, #tpu.memory_space<vmem>>, vector<8x2xf32>,
      %cst_6 = arith.constant 0.000000e+00 : f32
      %21 = vector.broadcast %cst_6 : f32 to vector<8x238xf32>
      %c0_7 = arith.constant 0 : index
      %c18 = arith.constant 18 : index
      %22 = vector.load %arg4[%c0_7, %c18] : memref<8x256xf32, #tpu.memory_space<vmem>>, vector<8x238xf32>
      tpu.vector_store %arg4[%c0_7, %c18], %21 {strides = array<i32>} : memref<8x256xf32, #tpu.memory_space<vmem>>, vector<8x238xf32>,
      %c0_8 = arith.constant 0 : index
      %c0_9 = arith.constant 0 : index
      %23 = vector.load %arg2[%c0_8, %c0_9] : memref<8x16xf32, #tpu.memory_space<vmem>>, vector<8x16xf32>
      %c0_10 = arith.constant 0 : index
      %c2 = arith.constant 2 : index
      %24 = vector.load %arg4[%c0_10, %c2] : memref<8x256xf32, #tpu.memory_space<vmem>>, vector<8x16xf32>
      tpu.vector_store %arg4[%c0_10, %c2], %23 {strides = array<i32>} : memref<8x256xf32, #tpu.memory_space<vmem>>, vector<8x16xf32>,
    } else {
    }
    %c128_i32 = arith.constant 128 : i32
    %3 = arith.muli %arg1, %c128_i32 : i32
    %4 = tpu.assume_multiple %3, 128 : i32
    %c0 = arith.constant 0 : index
    %5 = arith.index_cast %4 : i32 to index
    %6 = vector.load %arg4[%c0, %5] : memref<8x256xf32, #tpu.memory_space<vmem>>, vector<8x132xf32>
    %7 = vector.extract_strided_slice %6 {offsets = [0, 0], sizes = [8, 128], strides = [1, 1]} : vector<8x132xf32> to vector<8x128xf32>
    %8 = vector.extract_strided_slice %6 {offsets = [0, 1], sizes = [8, 128], strides = [1, 1]} : vector<8x132xf32> to vector<8x128xf32>
    %9 = arith.addf %7, %8 : vector<8x128xf32>
    %10 = vector.extract_strided_slice %6 {offsets = [0, 2], sizes = [8, 128], strides = [1, 1]} : vector<8x132xf32> to vector<8x128xf32>
    %11 = arith.addf %9, %10 : vector<8x128xf32>
    %12 = vector.extract_strided_slice %6 {offsets = [0, 3], sizes = [8, 128], strides = [1, 1]} : vector<8x132xf32> to vector<8x128xf32>
    %13 = arith.addf %11, %12 : vector<8x128xf32>
    %14 = vector.extract_strided_slice %6 {offsets = [0, 4], sizes = [8, 128], strides = [1, 1]} : vector<8x132xf32> to vector<8x128xf32>
    %15 = arith.addf %13, %14 : vector<8x128xf32>
    %cst = arith.constant 2.000000e-01 : f32
    %16 = vector.broadcast %cst : f32 to vector<8x128xf32>
    %17 = arith.mulf %15, %16 : vector<8x128xf32>
    %c0_1 = arith.constant 0 : index
    %c0_2 = arith.constant 0 : index
    %18 = vector.load %arg3[%c0_1, %c0_2] : memref<8x128xf32, #tpu.memory_space<vmem>>, vector<8x128xf32>
    tpu.vector_store %arg3[%c0_1, %c0_2], %17 {strides = array<i32>} : memref<8x128xf32, #tpu.memory_space<vmem>>, vector<8x128xf32>,
    return
  }
  func.func @transform_0(%arg0: i32, %arg1: i32) -> (i32, i32) {
    %c0_i32 = arith.constant 0 : i32
    %c0_i32_0 = arith.constant 0 : i32
    return %arg0, %c0_i32 : i32, i32
  }
  func.func @transform_1(%arg0: i32, %arg1: i32) -> (i32, i32) {
    %c0_i32 = arith.constant 0 : i32
    return %arg0, %arg1 : i32, i32
  }
}

</mosaic_0001>

<llo_original>
// kernel: moving_avg.1
$region0: #{moving_avg.1}
  #allocation0 [shape = 'u32[]', space=smem, size = 0x4, offset = 0x4, fixed_abs, tag = 'smem constant byte address 0x4 - core index']
  #allocation1 [shape = 'u32[144,128]{1,0:T(1,128)}', space=vmem, size = 0x12000, scoped, tag = 'internal scratch']
  #allocation2 [shape = 'f32[8,256]{1,0:T(8,128)}', space=vmem, size = 0x2000, scoped, tag = 'scratch operand']
  %s0 = inlined_call_operand.hbm [shape: f32[16,16], index: 0, kind: input, shape index: {}]
  %s1 = inlined_call_operand.vmem [shape: f32[16,128], index: 1, kind: output, shape index: {}]
  %s2 = sld [smem:[#allocation0]]
  $region45: #{moving_avg.1} parent=0
    _
  %s4 = ssub.s32 1, %s2
  %s5 = scalar_select 0, %s4, %s2
  $region1: #{moving_avg.1} parent=0
    #allocation3 [shape = 'u8[8192]{0}', space=vmem, size = 0x2000, scoped, tag = 'input window, operand 0']
    #allocation4 [shape = 's32[2]{0}', space=sflag, size = 0x8, scoped, tag = 'scoped memory for moving_avg.1']
    %6 = vsyncpa [#allocation4], 0
    %s7 = scalar_lea.sflag [#allocation4], 1
    %8 = vsyncpa %s7, 0
    loop: start=0, step=1, limit=4
    $region2: #{moving_avg.1} parent=1 // loop_pre_header
      _
    $region3: #{moving_avg.1} parent=1 // loop_header
      %s10 = sphi 0, %s14
      %p11 = scmp.ge.s32.totalorder %s10, 4
      %s17 = sphi 0, %s29
      %s18 = sphi 0, %s25
      %s19 = sphi 0, %s17
      %s20 = sphi 0, %s18
      %s21 = sphi 0, %s19
      %s22 = sphi 0, %s20
      %s32 = sphi 0, %s34
      %s35 = sphi 0, %s32
      %s36 = sphi 0, %s35
      %s52 = sphi 0, %s36
      %s60 = sphi 0, %s62
      %s63 = sphi 0, %s60
      %s64 = sphi 0, %s63
      %s80 = sphi 0, %s64
    $region4: #{moving_avg.1} parent=1 // loop_header_branch
      %13 = sbr.rel (%p11) target = $region8
    $region5: #{moving_avg.1} parent=1 // loop_body
      %s15 = ssub.s32 %s10, 1
      %s16 = ssub.s32 %s10, 2
      %s23 = sadd.s32 1, %s18
      %p24 = scmp.ge.s32.totalorder %s23, 1
      %s25 = scalar_select %p24, 0, %s23
      %s26 = sadd.s32 1, %s17
      %s27 = scalar_select %p24, %s26, %s17
      %p28 = scmp.ge.s32.totalorder %s27, 2
      %s29 = scalar_select %p28, 0, %s27
      %s30 = ssub.s32 %s17, %s29
      %p31 = scmp.eq.s32.totalorder %s30, 0
      %s33 = sadd.s32 %s32, 1
      %s34 = scalar_select %p31, %s32, %s33
      %p37 = pneg %p31
      %p38 = scmp.eq.s32.totalorder %s10, 1
      %p39 = por %p37, %p38
      %p40 = scmp.ne.s32.totalorder %s32, %s35
      %p41 = scmp.eq.s32.totalorder %s10, 0
      %p42 = por %p40, %p41
      %p43 = scmp.ne.s32.totalorder %s32, %s35
      %p44 = scmp.eq.s32.totalorder %s15, 1
      %p45 = por %p43, %p44
      %p46 = scmp.ne.s32.totalorder %s35, %s36
      %p47 = scmp.eq.s32.totalorder %s15, 0
      %p48 = por %p46, %p47
      %p49 = scmp.ne.s32.totalorder %s35, %s36
      %p50 = scmp.eq.s32.totalorder %s16, 1
      %p51 = por %p49, %p50
      %p53 = scmp.ne.s32.totalorder %s36, %s52
      %p54 = scmp.eq.s32.totalorder %s16, 0
      %p55 = por %p53, %p54
      %s56 = ssub.s32 %s17, %s29
      %s57 = ssub.s32 %s18, %s25
      %s58 = sor.u32 %s56, %s57
      %p59 = scmp.eq.s32.totalorder %s58, 0
      %s61 = sadd.s32 %s60, 1
      %s62 = scalar_select %p59, %s60, %s61
      %p65 = pneg %p59
      %p66 = scmp.eq.s32.totalorder %s10, 1
      %p67 = por %p65, %p66
      %p68 = scmp.ne.s32.totalorder %s60, %s63
      %p69 = scmp.eq.s32.totalorder %s10, 0
      %p70 = por %p68, %p69
      %p71 = scmp.ne.s32.totalorder %s60, %s63
      %p72 = scmp.eq.s32.totalorder %s15, 1
      %p73 = por %p71, %p72
      %p74 = scmp.ne.s32.totalorder %s63, %s64
      %p75 = scmp.eq.s32.totalorder %s15, 0
      %p76 = por %p74, %p75
      %p77 = scmp.ne.s32.totalorder %s63, %s64
      %p78 = scmp.eq.s32.totalorder %s16, 1
      %p79 = por %p77, %p78
      %p81 = scmp.ne.s32.totalorder %s64, %s80
      %p82 = scmp.eq.s32.totalorder %s16, 0
      %p83 = por %p81, %p82
      %p84 = scmp.le.s32.totalorder 1, %s10
      %p85 = scmp.lt.s32.totalorder %s10, 3
      %p86 = pnand %p84, %p85
      %p87 = pneg %p86
      // Predicated region
      $region9: #{moving_avg.1} parent=5 // pred_check
        _
      $region10: #{moving_avg.1} parent=5 // pred_check_branch
        %89 = sbr.rel (%p86) target = $region12
      $region11: #{moving_avg.1} parent=5 // pred_region
        %s90 = ssub.s32 %s10, 1
      $region12: #{moving_avg.1} parent=5 // pred_fallthru
        _
      %p91 = scmp.lt.s32.totalorder %s10, 2
      // Predicated region
      $region13: #{moving_avg.1} parent=5 // pred_check
        %p92 = pneg %p91
      $region14: #{moving_avg.1} parent=5 // pred_check_branch
        %94 = sbr.rel (%p92) target = $region16
      $region15: #{moving_avg.1} parent=5 // pred_region
        // Predicated region
        $region17: #{moving_avg.1} parent=15 // pred_check
          %p95 = pneg %p42
        $region18: #{moving_avg.1} parent=15 // pred_check_branch
          %97 = sbr.rel (%p95) target = $region20
        $region19: #{moving_avg.1} parent=15 // pred_region
          %s98 = sand.u32 %s32, 1
          %s99 = scalar_lea.sflag [#allocation4], %s98
          %s100 = sand.u32 %s32, 1
          %s101 = smul.addr %s100, 8
          %s102 = scalar_lea.vmem [#allocation3], %s101
          %s104 = ssub.s32 128, 128
          %105 = vsyncadd %s99, %s104
          %s106 = smul.addr %s17, 128
          %s107 = scalar_lea.hbm %s0, %s106
          %s109 = sshll.u32 %s102, 4
          %s110 = int_to_ptr.vmem [resolvable:$true] %s109
          %112 = dma.hbm_to_vmem [thread:$0]  %s107, 128, %s110, %s99
        $region20: #{moving_avg.1} parent=15 // pred_fallthru
          _
      $region16: #{moving_avg.1} parent=5 // pred_fallthru
        _
      %p113 = scmp.le.s32.totalorder 1, %s10
      %p114 = scmp.lt.s32.totalorder %s10, 3
      %p115 = pnand %p113, %p114
      %p116 = pneg %p115
      // Predicated region
      $region21: #{moving_avg.1} parent=5 // pred_check
        _
      $region22: #{moving_avg.1} parent=5 // pred_check_branch
        %118 = sbr.rel (%p115) target = $region24
      $region23: #{moving_avg.1} parent=5 // pred_region
        %s119 = ssub.s32 %s10, 1
        %s120 = sand.u32 %s35, 1
        %s121 = scalar_lea.sflag [#allocation4], %s120
        %s122 = sand.u32 %s35, 1
        %s123 = smul.addr %s122, 8
        %s124 = scalar_lea.vmem [#allocation3], %s123
        // Predicated region
        $region25: #{moving_avg.1} parent=23 // pred_check
          %p125 = pneg %p48
        $region26: #{moving_avg.1} parent=23 // pred_check_branch
          %127 = sbr.rel (%p125) target = $region28
        $region27: #{moving_avg.1} parent=23 // pred_region
          %128 = dma.done %s121, 128
        $region28: #{moving_avg.1} parent=23 // pred_fallthru
          _
        %s129 = sand.u32 %s35, 1
        %s130 = scalar_lea.sflag [#allocation4], %s129
        %s131 = sand.u32 %s35, 1
        %s132 = smul.addr %s131, 8
        %s133 = scalar_lea.vmem [#allocation3], %s132
        %p134 = pneg %p48
        %p135 = pneg %p45
        %p136 = pneg %p76
        %p137 = pneg %p73
        %p138 = scmp.lt.s32.totalorder %s19, 1
        %s139 = scalar_select %p138, %s19, 1
        %p140 = scmp.lt.s32.totalorder %s20, 0
        %s141 = scalar_select %p140, %s20, 0
        %s142 = sadd.s32 %s141, %s139
        %s143 = smul.addr %s142, 8
        %s144 = scalar_lea.vmem %s1, %s143
        %p145 = scmp.lt.s32.totalorder %s19, 1
        %s146 = scalar_select %p145, %s19, 1
        %p147 = scmp.lt.s32.totalorder %s20, 0
        %s148 = scalar_select %p147, %s20, 0
        %s149 = sadd.s32 %s148, %s146
        %s150 = smul.addr %s149, 8
        %s151 = scalar_lea.vmem %s1, %s150
        %p152 = scmp.eq.s32.totalorder %s20, 0
        // Predicated region
        $region29: #{moving_avg.1} parent=23 // pred_check
          %p153 = pneg %p152
        $region30: #{moving_avg.1} parent=23 // pred_check_branch
          %155 = sbr.rel (%p153) target = $region32
        $region31: #{moving_avg.1} parent=23 // pred_region
          %vm156 = vcmask 15360
          %157 = vst.msk [vmem:[#allocation2] sm:$0xff] %vm156, 0.0
          %vm158 = vcmask 1047696
          %159 = vst.msk [vmem:[#allocation2] sm:$0xff] %vm158, 0.0
          %160 = vst [vmem:[#allocation2 + $0x8] sm:$0xff] 0.0
          %v161 = vld [vmem:[%s124] sm:$0xff]
          %163 = vrot.lane.b32.xlu0 %v161, 2
          %v164 = vpop.permute.xlu0 %163
          %vm166 = vcmask 146448
          %167 = vst.msk [vmem:[#allocation2] sm:$0xff] %vm166, %v164
        $region32: #{moving_avg.1} parent=23 // pred_fallthru
          _
        %s168 = smul.u32 %s20, 128
        %s169 = sshra.s32 %s168, 7
        %s170 = sand.u32 %s168, 127
        %s171 = smul.addr %s169, 8
        %s172 = scalar_lea.vmem [#allocation2], %s171
        %v173 = vld [vmem:[%s172] sm:$0xff]
        %v174 = vld [vmem:[%s172 + $0x8] sm:$0xff]
        %177 = vrot.lane.b32.xlu0 %v173, 127
        %v178 = vpop.permute.xlu0 %177
        %179 = vrot.lane.b32.xlu0 %v174, 127
        %v180 = vpop.permute.xlu0 %179
        %vm181 = vcmask 1039360
        %v182 = vsel %vm181, %v178, %v180
        %v184 = vadd.f32 %v173, %v182
        %185 = vrot.lane.b32.xlu0 %v173, 126
        %v186 = vpop.permute.xlu0 %185
        %187 = vrot.lane.b32.xlu0 %v174, 126
        %v188 = vpop.permute.xlu0 %187
        %vm189 = vcmask 1031168
        %v190 = vsel %vm189, %v186, %v188
        %v192 = vadd.f32 %v184, %v190
        %193 = vrot.lane.b32.xlu0 %v173, 125
        %v194 = vpop.permute.xlu0 %193
        %195 = vrot.lane.b32.xlu0 %v174, 125
        %v196 = vpop.permute.xlu0 %195
        %vm197 = vcmask 1022976
        %v198 = vsel %vm197, %v194, %v196
        %v200 = vadd.f32 %v192, %v198
        %201 = vrot.lane.b32.xlu0 %v173, 124
        %v202 = vpop.permute.xlu0 %201
        %203 = vrot.lane.b32.xlu0 %v174, 124
        %v204 = vpop.permute.xlu0 %203
        %vm205 = vcmask 1014784
        %v206 = vsel %vm205, %v202, %v204
        %v208 = vadd.f32 %v200, %v206
        %v209 = vmul.f32 %v208, 0.2
        %210 = vst [vmem:[%s151] sm:$0xff] %v209
        %p211 = scmp.lt.s32.totalorder %s19, 1
        %s212 = scalar_select %p211, %s19, 1
        %p213 = scmp.lt.s32.totalorder %s20, 0
        %s214 = scalar_select %p213, %s20, 0
        %s215 = sadd.s32 %s214, %s212
        %s216 = smul.addr %s215, 8
        %s217 = scalar_lea.vmem %s1, %s216
        // Predicated region
        $region33: #{moving_avg.1} parent=23 // pred_check
          %p218 = pneg %p73
        $region34: #{moving_avg.1} parent=23 // pred_check_branch
          %220 = sbr.rel (%p218) target = $region36
        $region35: #{moving_avg.1} parent=23 // pred_region
          _
        $region36: #{moving_avg.1} parent=23 // pred_fallthru
          _
      $region24: #{moving_avg.1} parent=5 // pred_fallthru
        _
      %p221 = scmp.le.s32.totalorder 2, %s10
      // Predicated region
      $region37: #{moving_avg.1} parent=5 // pred_check
        %p222 = pneg %p221
      $region38: #{moving_avg.1} parent=5 // pred_check_branch
        %224 = sbr.rel (%p222) target = $region40
      $region39: #{moving_avg.1} parent=5 // pred_region
        %s225 = ssub.s32 %s10, 2
        // Predicated region
        $region41: #{moving_avg.1} parent=39 // pred_check
          %p226 = pneg %p79
        $region42: #{moving_avg.1} parent=39 // pred_check_branch
          %228 = sbr.rel (%p226) target = $region44
        $region43: #{moving_avg.1} parent=39 // pred_region
          %p229 = scmp.lt.s32.totalorder %s21, 1
          %s230 = scalar_select %p229, %s21, 1
          %p231 = scmp.lt.s32.totalorder %s22, 0
          %s232 = scalar_select %p231, %s22, 0
          %s233 = sadd.s32 %s232, %s230
          %s234 = smul.addr %s233, 8
          %s235 = scalar_lea.vmem %s1, %s234
        $region44: #{moving_avg.1} parent=39 // pred_fallthru
          _
      $region40: #{moving_avg.1} parent=5 // pred_fallthru
        _
    $region6: #{moving_avg.1} parent=1 // loop_footer
      %s14 = sadd.s32 1, %s10
    $region7: #{moving_avg.1} parent=1 // loop_footer_branch
      %9 = sbr.rel target = $region3
    $region8: #{moving_avg.1} parent=1 // loop_exit
      _
    %236 = vsyncpa [#allocation4], 1
    %s237 = scalar_lea.sflag [#allocation4], 1
    %238 = vsyncpa %s237, 1

</llo_original>
